<compile_context>
chip_gen: v6e
topology: v6e:2x2x1
jax: 0.10.0
libtpu: 0.0.40
codegen_flags: <defaults>
</compile_context>

<pallas_src>
import jax
import jax.numpy as jnp
from jax.experimental import pallas as pl
from jax.experimental.pallas import tpu as pltpu


def _disc_kernel(s_ref, a_ref, w1s_ref, w1a_ref, b1_ref,
                 w2_ref, b2_ref, w3_ref, b3_ref, o_ref):
    # s_ref:   [TB, StateDim]  (bf16)      a_ref:   [TB, ActionNum] (bf16)
    # w1s_ref: [StateDim, 128] (bf16)      w1a_ref: [ActionNum, 128] (bf16)
    # w2_ref:  [128, 64] (bf16)            w3_ref:  [1, 64] (f32)
    # b*_ref:  f32 row vectors             o_ref:   [TB, 1] (f32)

    # Layer 1: concat fused as a split matmul (bf16 x bf16 -> f32 on the MXU).
    h1 = (jnp.dot(s_ref[...], w1s_ref[...], preferred_element_type=jnp.float32)
          + jnp.dot(a_ref[...], w1a_ref[...], preferred_element_type=jnp.float32)
          + b1_ref[...])
    h1 = jnp.maximum(h1, 0.0)

    # Layer 2: cast activation to bf16 for the MXU, accumulate in f32.
    h2 = jnp.dot(h1.astype(jnp.bfloat16), w2_ref[...],
                 preferred_element_type=jnp.float32) + b2_ref[...]
    h2 = jnp.maximum(h2, 0.0)

    # Layer 3 (64 -> 1): VPU multiply + XLU lane-reduce in f32 — avoids an MXU
    # matmul that would use only 1 of 128/256 output columns.
    logits = jnp.sum(h2 * w3_ref[...], axis=-1, keepdims=True) + b3_ref[...]
    o_ref[...] = jax.nn.sigmoid(logits)


def _round_up(x, m):
    return ((x + m - 1) // m) * m


def discriminator_forward(state, action, params, *, tile_b=2048):
    """state: [B, StateDim], action: [B, ActionNum]. Returns sigmoid probs [B, 1]."""
    w1, b1, w2, b2, w3, b3 = params
    B, sd = state.shape
    an = action.shape[1]

    # PyTorch Linear weights are (out, in): transpose to (in, out) and split W1
    # into its state / action halves so the concat never materializes in HBM.
    w1t = jnp.asarray(w1, jnp.float32).T                    # [sd+an, 128]
    w1s = w1t[:sd].astype(jnp.bfloat16)                     # [sd, 128]
    w1a = w1t[sd:].astype(jnp.bfloat16)                     # [an, 128]
    w2t = jnp.asarray(w2, jnp.float32).T.astype(jnp.bfloat16)   # [128, 64]
    w3r = jnp.asarray(w3, jnp.float32).reshape(1, -1)        # [1, 64] (f32, VPU path)
    b1r = jnp.asarray(b1, jnp.float32).reshape(1, -1)        # [1, 128]
    b2r = jnp.asarray(b2, jnp.float32).reshape(1, -1)        # [1, 64]
    b3r = jnp.asarray(b3, jnp.float32).reshape(1, 1)         # [1, 1]

    s = state.astype(jnp.bfloat16)
    a = action.astype(jnp.bfloat16)

    # Choose a batch tile: multiple of 8 sublanes, capped at tile_b.
    tile_b = _round_up(int(tile_b), 8)
    TB = min(tile_b, _round_up(B, 8))
    B_pad = _round_up(B, TB)
    if B_pad != B:
        s = jnp.pad(s, ((0, B_pad - B), (0, 0)))
        a = jnp.pad(a, ((0, B_pad - B), (0, 0)))
    grid = (B_pad // TB,)

    def batch_spec(cols):
        return pl.BlockSpec((TB, cols), lambda i: (i, 0))

    def const_spec(arr):
        # Constant block index -> DMA'd once, stays VMEM-resident across steps.
        return pl.BlockSpec(arr.shape, lambda i: (0, 0))

    out = pl.pallas_call(
        _disc_kernel,
        out_shape=jax.ShapeDtypeStruct((B_pad, 1), jnp.float32),
        grid=grid,
        in_specs=[batch_spec(sd), batch_spec(an),
                  const_spec(w1s), const_spec(w1a), const_spec(b1r),
                  const_spec(w2t), const_spec(b2r),
                  const_spec(w3r), const_spec(b3r)],
        out_specs=pl.BlockSpec((TB, 1), lambda i: (i, 0)),
        compiler_params=pltpu.CompilerParams(
            dimension_semantics=("parallel",),
            vmem_limit_bytes=32 << 20),
    )(s, a, w1s, w1a, b1r, w2t, b2r, w3r, b3r)
    return out[:B]


def init_params(key, state_dim, action_num):
    """Deterministic init matching nn.Linear shapes ((out, in) convention)."""
    in_dim = state_dim + action_num
    ks = jax.random.split(key, 6)

    def uniform(k, shape, fan_in):
        bound = 1.0 / jnp.sqrt(fan_in)
        return jax.random.uniform(k, shape, jnp.float32, -bound, bound)

    w1 = uniform(ks[0], (128, in_dim), in_dim)
    b1 = uniform(ks[1], (128,), in_dim)
    w2 = uniform(ks[2], (64, 128), 128)
    b2 = uniform(ks[3], (64,), 128)
    w3 = uniform(ks[4], (1, 64), 64)
    b3 = uniform(ks[5], (1,), 64)
    return (w1, b1, w2, b2, w3, b3)


def reference_forward(state, action, params):
    w1, b1, w2, b2, w3, b3 = params
    x = jnp.concatenate([state, action], axis=1)
    h1 = jnp.maximum(x @ w1.T + b1, 0.0)
    h2 = jnp.maximum(h1 @ w2.T + b2, 0.0)
    return jax.nn.sigmoid(h2 @ w3.T + b3)


if __name__ == "__main__":
    StateDim, ActionNum = 12, 4

    key = jax.random.PRNGKey(0)
    kp, ks, ka = jax.random.split(key, 3)
    params = init_params(kp, StateDim, ActionNum)

    # Case 1: batch that divides the tile exactly.
    B = 8
    state = jax.random.normal(ks, (B, StateDim), jnp.float32)
    act_idx = jax.random.randint(ka, (B,), 0, ActionNum)
    action = jax.nn.one_hot(act_idx, ActionNum, dtype=jnp.float32)

    out = jax.block_until_ready(discriminator_forward(state, action, params))
    ref = reference_forward(state, action, params)
    assert out.shape == (B, 1), out.shape
    # bf16 matmul operands -> looser tolerance than pure f32.
    assert jnp.allclose(out, ref, atol=2e-2, rtol=0.0), (out, ref)

    # Case 2: batch that requires padding to the tile boundary.
    B2 = 10
    state2 = jax.random.normal(ks, (B2, StateDim), jnp.float32)
    act_idx2 = jax.random.randint(ka, (B2,), 0, ActionNum)
    action2 = jax.nn.one_hot(act_idx2, ActionNum, dtype=jnp.float32)

    out2 = jax.block_until_ready(discriminator_forward(state2, action2, params))
    ref2 = reference_forward(state2, action2, params)
    assert out2.shape == (B2, 1), out2.shape
    assert jnp.allclose(out2, ref2, atol=2e-2, rtol=0.0), (out2, ref2)

    print("KERNEL_OK")
</pallas_src>

<mosaic_0001>
module attributes {stable_mosaic.version = 11 : i64} {
  func.func @_disc_kernel(%arg0: i32, %arg1: memref<8x12xbf16, #tpu.memory_space<vmem>>, %arg2: memref<8x4xbf16, #tpu.memory_space<vmem>>, %arg3: memref<12x128xbf16, #tpu.memory_space<vmem>>, %arg4: memref<4x128xbf16, #tpu.memory_space<vmem>>, %arg5: memref<1x128xf32, #tpu.memory_space<vmem>>, %arg6: memref<128x64xbf16, #tpu.memory_space<vmem>>, %arg7: memref<1x64xf32, #tpu.memory_space<vmem>>, %arg8: memref<1x64xf32, #tpu.memory_space<vmem>>, %arg9: memref<1x1xf32, #tpu.memory_space<vmem>>, %arg10: memref<8x1xf32, #tpu.memory_space<vmem>>) attributes {dimension_semantics = [#tpu.dimension_semantics<parallel>], iteration_bounds = array<i64: 1>, scalar_prefetch = 0 : i64, scratch_operands = 0 : i64, tpu.core_type = #tpu.core_type<tc>, window_params = [{transform_indices = @transform_0, window_bounds = array<i64: 8, 12>}, {transform_indices = @transform_1, window_bounds = array<i64: 8, 4>}, {pipeline_mode = #tpu.pipeline_mode<synchronous>, transform_indices = @transform_2, window_bounds = array<i64: 12, 128>}, {pipeline_mode = #tpu.pipeline_mode<synchronous>, transform_indices = @transform_3, window_bounds = array<i64: 4, 128>}, {pipeline_mode = #tpu.pipeline_mode<synchronous>, transform_indices = @transform_4, window_bounds = array<i64: 1, 128>}, {pipeline_mode = #tpu.pipeline_mode<synchronous>, transform_indices = @transform_5, window_bounds = array<i64: 128, 64>}, {pipeline_mode = #tpu.pipeline_mode<synchronous>, transform_indices = @transform_6, window_bounds = array<i64: 1, 64>}, {pipeline_mode = #tpu.pipeline_mode<synchronous>, transform_indices = @transform_7, window_bounds = array<i64: 1, 64>}, {pipeline_mode = #tpu.pipeline_mode<synchronous>, transform_indices = @transform_8, window_bounds = array<i64: 1, 1>}, {transform_indices = @transform_9, window_bounds = array<i64: 8, 1>}]} {
    %c0 = arith.constant 0 : index
    %c0_0 = arith.constant 0 : index
    %0 = vector.load %arg1[%c0, %c0_0] : memref<8x12xbf16, #tpu.memory_space<vmem>>, vector<8x12xbf16>
    %c0_1 = arith.constant 0 : index
    %c0_2 = arith.constant 0 : index
    %1 = vector.load %arg3[%c0_1, %c0_2] : memref<12x128xbf16, #tpu.memory_space<vmem>>, vector<12x128xbf16>
    %cst = arith.constant dense<0.000000e+00> : vector<8x128xf32>
    %2 = tpu.matmul %0, %1, %cst {dimension_numbers = #tpu.dot_dimension_numbers<[1], [0], [0], [1], [0, 0, 1, 1], [], []>} : vector<8x12xbf16>, vector<12x128xbf16>, vector<8x128xf32> -> vector<8x128xf32>
    %c0_3 = arith.constant 0 : index
    %c0_4 = arith.constant 0 : index
    %3 = vector.load %arg2[%c0_3, %c0_4] : memref<8x4xbf16, #tpu.memory_space<vmem>>, vector<8x4xbf16>
    %c0_5 = arith.constant 0 : index
    %c0_6 = arith.constant 0 : index
    %4 = vector.load %arg4[%c0_5, %c0_6] : memref<4x128xbf16, #tpu.memory_space<vmem>>, vector<4x128xbf16>
    %cst_7 = arith.constant dense<0.000000e+00> : vector<8x128xf32>
    %5 = tpu.matmul %3, %4, %cst_7 {dimension_numbers = #tpu.dot_dimension_numbers<[1], [0], [0], [1], [0, 0, 1, 1], [], []>} : vector<8x4xbf16>, vector<4x128xbf16>, vector<8x128xf32> -> vector<8x128xf32>
    %6 = arith.addf %2, %5 : vector<8x128xf32>
    %c0_8 = arith.constant 0 : index
    %c0_9 = arith.constant 0 : index
    %7 = vector.load %arg5[%c0_8, %c0_9] : memref<1x128xf32, #tpu.memory_space<vmem>>, vector<1x128xf32>
    %8 = vector.broadcast %7 : vector<1x128xf32> to vector<8x128xf32>
    %9 = arith.addf %6, %8 : vector<8x128xf32>
    %cst_10 = arith.constant 0.000000e+00 : f32
    %10 = vector.broadcast %cst_10 : f32 to vector<8x128xf32>
    %11 = arith.maximumf %9, %10 : vector<8x128xf32>
    %12 = arith.truncf %11 : vector<8x128xf32> to vector<8x128xbf16>
    %c0_11 = arith.constant 0 : index
    %c0_12 = arith.constant 0 : index
    %13 = vector.load %arg6[%c0_11, %c0_12] : memref<128x64xbf16, #tpu.memory_space<vmem>>, vector<128x64xbf16>
    %cst_13 = arith.constant dense<0.000000e+00> : vector<8x64xf32>
    %14 = tpu.matmul %12, %13, %cst_13 {dimension_numbers = #tpu.dot_dimension_numbers<[1], [0], [0], [1], [0, 0, 1, 1], [], []>} : vector<8x128xbf16>, vector<128x64xbf16>, vector<8x64xf32> -> vector<8x64xf32>
    %c0_14 = arith.constant 0 : index
    %c0_15 = arith.constant 0 : index
    %15 = vector.load %arg7[%c0_14, %c0_15] : memref<1x64xf32, #tpu.memory_space<vmem>>, vector<1x64xf32>
    %16 = vector.broadcast %15 : vector<1x64xf32> to vector<8x64xf32>
    %17 = arith.addf %14, %16 : vector<8x64xf32>
    %cst_16 = arith.constant 0.000000e+00 : f32
    %18 = vector.broadcast %cst_16 : f32 to vector<8x64xf32>
    %19 = arith.maximumf %17, %18 : vector<8x64xf32>
    %c0_17 = arith.constant 0 : index
    %c0_18 = arith.constant 0 : index
    %20 = vector.load %arg8[%c0_17, %c0_18] : memref<1x64xf32, #tpu.memory_space<vmem>>, vector<1x64xf32>
    %21 = vector.broadcast %20 : vector<1x64xf32> to vector<8x64xf32>
    %22 = arith.mulf %19, %21 : vector<8x64xf32>
    %cst_19 = arith.constant dense<0.000000e+00> : vector<8xf32>
    %23 = vector.multi_reduction <add>, %22, %cst_19 [1] : vector<8x64xf32> to vector<8xf32>
    %24 = vector.shape_cast %23 : vector<8xf32> to vector<8x1xf32>
    %c0_20 = arith.constant 0 : index
    %c0_21 = arith.constant 0 : index
    %25 = vector.load %arg9[%c0_20, %c0_21] : memref<1x1xf32, #tpu.memory_space<vmem>>, vector<1x1xf32>
    %26 = vector.broadcast %25 : vector<1x1xf32> to vector<8x1xf32>
    %27 = arith.addf %24, %26 : vector<8x1xf32>
    %28 = arith.negf %27 : vector<8x1xf32>
    %29 = math.exp %28 : vector<8x1xf32>
    %cst_22 = arith.constant 1.000000e+00 : f32
    %30 = vector.broadcast %cst_22 : f32 to vector<8x1xf32>
    %31 = arith.addf %30, %29 : vector<8x1xf32>
    %32 = arith.divf %30, %31 : vector<8x1xf32>
    %c0_23 = arith.constant 0 : index
    %c0_24 = arith.constant 0 : index
    %33 = vector.load %arg10[%c0_23, %c0_24] : memref<8x1xf32, #tpu.memory_space<vmem>>, vector<8x1xf32>
    tpu.vector_store %arg10[%c0_23, %c0_24], %32 {strides = array<i32>} : memref<8x1xf32, #tpu.memory_space<vmem>>, vector<8x1xf32>,
    return
  }
  func.func @transform_0(%arg0: i32) -> (i32, i32) {
    %c0_i32 = arith.constant 0 : i32
    %c0_i32_0 = arith.constant 0 : i32
    return %arg0, %c0_i32 : i32, i32
  }
  func.func @transform_1(%arg0: i32) -> (i32, i32) {
    %c0_i32 = arith.constant 0 : i32
    %c0_i32_0 = arith.constant 0 : i32
    return %arg0, %c0_i32 : i32, i32
  }
  func.func @transform_2(%arg0: i32) -> (i32, i32) {
    %c0_i32 = arith.constant 0 : i32
    %c0_i32_0 = arith.constant 0 : i32
    %c0_i32_1 = arith.constant 0 : i32
    return %c0_i32, %c0_i32_0 : i32, i32
  }
  func.func @transform_3(%arg0: i32) -> (i32, i32) {
    %c0_i32 = arith.constant 0 : i32
    %c0_i32_0 = arith.constant 0 : i32
    %c0_i32_1 = arith.constant 0 : i32
    return %c0_i32, %c0_i32_0 : i32, i32
  }
  func.func @transform_4(%arg0: i32) -> (i32, i32) {
    %c0_i32 = arith.constant 0 : i32
    %c0_i32_0 = arith.constant 0 : i32
    %c0_i32_1 = arith.constant 0 : i32
    return %c0_i32, %c0_i32_0 : i32, i32
  }
  func.func @transform_5(%arg0: i32) -> (i32, i32) {
    %c0_i32 = arith.constant 0 : i32
    %c0_i32_0 = arith.constant 0 : i32
    %c0_i32_1 = arith.constant 0 : i32
    return %c0_i32, %c0_i32_0 : i32, i32
  }
  func.func @transform_6(%arg0: i32) -> (i32, i32) {
    %c0_i32 = arith.constant 0 : i32
    %c0_i32_0 = arith.constant 0 : i32
    %c0_i32_1 = arith.constant 0 : i32
    return %c0_i32, %c0_i32_0 : i32, i32
  }
  func.func @transform_7(%arg0: i32) -> (i32, i32) {
    %c0_i32 = arith.constant 0 : i32
    %c0_i32_0 = arith.constant 0 : i32
    %c0_i32_1 = arith.constant 0 : i32
    return %c0_i32, %c0_i32_0 : i32, i32
  }
  func.func @transform_8(%arg0: i32) -> (i32, i32) {
    %c0_i32 = arith.constant 0 : i32
    %c0_i32_0 = arith.constant 0 : i32
    %c0_i32_1 = arith.constant 0 : i32
    return %c0_i32, %c0_i32_0 : i32, i32
  }
  func.func @transform_9(%arg0: i32) -> (i32, i32) {
    %c0_i32 = arith.constant 0 : i32
    %c0_i32_0 = arith.constant 0 : i32
    return %arg0, %c0_i32 : i32, i32
  }
}

</mosaic_0001>

<llo_original>
// kernel: tpu_custom_call.1
$region0: #{tpu_custom_call.1}
  #allocation0 [shape = 'u32[]', space=smem, size = 0x4, offset = 0x4, fixed_abs, tag = 'smem constant byte address 0x4 - core index']
  #allocation1 [shape = 'u32[144,128]{1,0:T(1,128)}', space=vmem, size = 0x12000, scoped, tag = 'internal scratch']
  #allocation2 [shape = 'f32[1,1]{1,0:T(1,128)S(1)}', space=vmem, size = 0x200, scoped, tag = 'scoped memory for tpu_custom_call.1']
  %s0 = inlined_call_operand.vmem [shape: bf16[8,12], index: 0, kind: input, shape index: {}]
  %s1 = inlined_call_operand.vmem [shape: bf16[8,4], index: 1, kind: input, shape index: {}]
  %s2 = inlined_call_operand.vmem [shape: bf16[12,128], index: 2, kind: input, shape index: {}]
  %s3 = inlined_call_operand.vmem [shape: bf16[4,128], index: 3, kind: input, shape index: {}]
  %s4 = inlined_call_operand.vmem [shape: f32[1,128], index: 4, kind: input, shape index: {}]
  %s5 = inlined_call_operand.vmem [shape: bf16[128,64], index: 5, kind: input, shape index: {}]
  %s6 = inlined_call_operand.vmem [shape: f32[1,64], index: 6, kind: input, shape index: {}]
  %s7 = inlined_call_operand.vmem [shape: f32[1,64], index: 7, kind: input, shape index: {}]
  %s8 = inlined_call_operand.<no memory space> [shape: f32[1,1], index: 8, kind: input, shape index: {}]
  %s9 = inlined_call_operand.vmem [shape: f32[8,1], index: 9, kind: output, shape index: {}]
  %s10 = sld [smem:[#allocation0]]
  $region46: #{tpu_custom_call.1} parent=0
    _
  %s12 = ssub.s32 1, %s10
  %s13 = scalar_select 0, %s12, %s10
  %v14 = vstv %s8
  %15 = vst [vmem:[#allocation2] sm:$0x1] %v14
  // Predicated region
  $region2: #{tpu_custom_call.1} parent=0 // pred_check
    _
  $region3: #{tpu_custom_call.1} parent=0 // pred_check_branch
    %17 = sbr.rel (0) target = $region5
  $region4: #{tpu_custom_call.1} parent=0 // pred_region
    _
  $region5: #{tpu_custom_call.1} parent=0 // pred_fallthru
    _
  // Predicated region
  $region6: #{tpu_custom_call.1} parent=0 // pred_check
    _
  $region7: #{tpu_custom_call.1} parent=0 // pred_check_branch
    %19 = sbr.rel (0) target = $region9
  $region8: #{tpu_custom_call.1} parent=0 // pred_region
    _
  $region9: #{tpu_custom_call.1} parent=0 // pred_fallthru
    _
  // Predicated region
  $region10: #{tpu_custom_call.1} parent=0 // pred_check
    _
  $region11: #{tpu_custom_call.1} parent=0 // pred_check_branch
    %21 = sbr.rel (0) target = $region13
  $region12: #{tpu_custom_call.1} parent=0 // pred_region
    _
  $region13: #{tpu_custom_call.1} parent=0 // pred_fallthru
    _
  // Predicated region
  $region14: #{tpu_custom_call.1} parent=0 // pred_check
    _
  $region15: #{tpu_custom_call.1} parent=0 // pred_check_branch
    %23 = sbr.rel (0) target = $region17
  $region16: #{tpu_custom_call.1} parent=0 // pred_region
    _
  $region17: #{tpu_custom_call.1} parent=0 // pred_fallthru
    _
  // Predicated region
  $region18: #{tpu_custom_call.1} parent=0 // pred_check
    _
  $region19: #{tpu_custom_call.1} parent=0 // pred_check_branch
    %25 = sbr.rel (0) target = $region21
  $region20: #{tpu_custom_call.1} parent=0 // pred_region
    _
  $region21: #{tpu_custom_call.1} parent=0 // pred_fallthru
    _
  // Predicated region
  $region22: #{tpu_custom_call.1} parent=0 // pred_check
    _
  $region23: #{tpu_custom_call.1} parent=0 // pred_check_branch
    %27 = sbr.rel (0) target = $region25
  $region24: #{tpu_custom_call.1} parent=0 // pred_region
    _
  $region25: #{tpu_custom_call.1} parent=0 // pred_fallthru
    _
  // Predicated region
  $region26: #{tpu_custom_call.1} parent=0 // pred_check
    _
  $region27: #{tpu_custom_call.1} parent=0 // pred_check_branch
    %29 = sbr.rel (0) target = $region29
  $region28: #{tpu_custom_call.1} parent=0 // pred_region
    _
  $region29: #{tpu_custom_call.1} parent=0 // pred_fallthru
    _
  // Predicated region
  $region30: #{tpu_custom_call.1} parent=0 // pred_check
    _
  $region31: #{tpu_custom_call.1} parent=0 // pred_check_branch
    %31 = sbr.rel (0) target = $region33
  $region32: #{tpu_custom_call.1} parent=0 // pred_region
    _
  $region33: #{tpu_custom_call.1} parent=0 // pred_fallthru
    _
  // Predicated region
  $region34: #{tpu_custom_call.1} parent=0 // pred_check
    _
  $region35: #{tpu_custom_call.1} parent=0 // pred_check_branch
    %33 = sbr.rel (0) target = $region37
  $region36: #{tpu_custom_call.1} parent=0 // pred_region
    _
  $region37: #{tpu_custom_call.1} parent=0 // pred_fallthru
    _
  %v35 = vld [vmem:[%s0] sm:$0xf]
  %v36 = vld [vmem:[%s2] sm:$0xf]
  %v37 = vld [vmem:[%s2 + $0x4] sm:$0x3]
  %v38 = vld [vmem:[%s1] sm:$0xf]
  %v39 = vld [vmem:[%s3] sm:$0x3]
  %vm40 = vcmask 31744
  %v42 = vsel %vm40, %v38, 0
  %vm44 = vcmask 1041408
  %v46 = vsel %vm44, %v39, 0
  %48 = vmatprep.subr.bf16.mxu0 0
  %49 = vmatpush1.bf16.msra.mxu0 0
  %50 = vmatprep.subr.bf16.mxu0 0
  %51 = vmatpush1.bf16.msra.mxu0 0
  %52 = vmatprep.subr.bf16.mxu0 0
  %53 = vmatpush1.bf16.msra.mxu0 0
  %54 = vmatprep.subr.bf16.mxu0 0
  %55 = vmatpush1.bf16.msra.mxu0 0
  %56 = vmatprep.subr.bf16.mxu0 0
  %57 = vmatpush1.bf16.msra.mxu0 0
  %58 = vmatprep.subr.bf16.mxu0 0
  %59 = vmatpush1.bf16.msra.mxu0 0
  %60 = vmatprep.subr.bf16.mxu0 0
  %61 = vmatpush1.bf16.msra.mxu0 0
  %62 = vmatprep.subr.bf16.mxu0 0
  %63 = vmatpush1.bf16.msra.mxu0 %v46
  %64 = vmatprep.subr.bf16.mxu0 0
  %65 = vmatpush2.bf16.msra.mxu0 0
  %66 = vmatprep.subr.bf16.mxu0 0
  %67 = vmatpush2.bf16.msra.mxu0 0
  %68 = vmatprep.subr.bf16.mxu0 0
  %69 = vmatpush2.bf16.msra.mxu0 0
  %70 = vmatprep.subr.bf16.mxu0 0
  %71 = vmatpush2.bf16.msra.mxu0 0
  %72 = vmatprep.subr.bf16.mxu0 0
  %73 = vmatpush2.bf16.msra.mxu0 0
  %74 = vmatprep.subr.bf16.mxu0 0
  %75 = vmatpush2.bf16.msra.mxu0 0
  %76 = vmatprep.subr.bf16.mxu0 0
  %77 = vmatpush2.bf16.msra.mxu0 0
  %78 = vmatprep.subr.bf16.mxu0 0
  %79 = vmatpush2.bf16.msra.mxu0 0
  %80 = vmatprep.mubr.bf16.mxu0 0
  %81 = vmatmul.mubr.bf16.gmra.mxu0 %v42
  %v82 = vpop.f32.mrf.mxu0
  %v83 = vadd.f32 0.0, %v82
  %v84 = vpop.f32.mrf.mxu0
  %v85 = vpop.f32.mrf.mxu0
  %v86 = vpop.f32.mrf.mxu0
  %87 = vdwg.mxu0
  %v90 = vunpack.c.l.b16 %v36
  %v91 = vunpack.c.l.b16 %v37
  %v92 = vpack.c.b16 %v91, %v90
  %vm93 = vcmask 97280
  %v95 = vsel %vm93, %v35, 0
  %vm97 = vcmask 1045504
  %v99 = vsel %vm97, %v92, 0
  %101 = vmatprep.subr.bf16.mxu0 0
  %102 = vmatpush1.bf16.msra.mxu0 0
  %103 = vmatprep.subr.bf16.mxu0 0
  %104 = vmatpush1.bf16.msra.mxu0 0
  %105 = vmatprep.subr.bf16.mxu0 0
  %106 = vmatpush1.bf16.msra.mxu0 0
  %107 = vmatprep.subr.bf16.mxu0 0
  %108 = vmatpush1.bf16.msra.mxu0 0
  %109 = vmatprep.subr.bf16.mxu0 0
  %110 = vmatpush1.bf16.msra.mxu0 0
  %111 = vmatprep.subr.bf16.mxu0 0
  %112 = vmatpush1.bf16.msra.mxu0 0
  %113 = vmatprep.subr.bf16.mxu0 0
  %114 = vmatpush1.bf16.msra.mxu0 0
  %115 = vmatprep.subr.bf16.mxu0 0
  %116 = vmatpush1.bf16.msra.mxu0 %v99
  %117 = vmatprep.subr.bf16.mxu0 0
  %118 = vmatpush2.bf16.msra.mxu0 0
  %119 = vmatprep.subr.bf16.mxu0 0
  %120 = vmatpush2.bf16.msra.mxu0 0
  %121 = vmatprep.subr.bf16.mxu0 0
  %122 = vmatpush2.bf16.msra.mxu0 0
  %123 = vmatprep.subr.bf16.mxu0 0
  %124 = vmatpush2.bf16.msra.mxu0 0
  %125 = vmatprep.subr.bf16.mxu0 0
  %126 = vmatpush2.bf16.msra.mxu0 0
  %127 = vmatprep.subr.bf16.mxu0 0
  %128 = vmatpush2.bf16.msra.mxu0 0
  %129 = vmatprep.subr.bf16.mxu0 0
  %130 = vmatpush2.bf16.msra.mxu0 0
  %131 = vmatprep.subr.bf16.mxu0 0
  %132 = vmatpush2.bf16.msra.mxu0 0
  %133 = vmatprep.mubr.bf16.mxu0 0
  %134 = vmatmul.mubr.bf16.gmra.mxu0 %v95
  %v135 = vpop.f32.mrf.mxu0
  %v136 = vadd.f32 %v83, %v135
  %v137 = vpop.f32.mrf.mxu0
  %v138 = vpop.f32.mrf.mxu0
  %v139 = vpop.f32.mrf.mxu0
  %140 = vdwg.mxu0
  %v141 = vld [vmem:[%s4] sm:$0x1]
  %v143 = vlaneseq
  %v144 = vshrl.u32 %v143, 7
  %v145 = vsub.s32 0, %v144
  %v146 = vrot.slane %v141, %v145
  %v148 = vadd.f32 %v136, %v146
  %v149 = vmax.f32 %v148, 0.0
  %v150 = vpack.c.bf16 %v149, %v149
  %v151 = vld [vmem:[%s5] sm:$0xf]
  %v152 = vld [vmem:[%s5 + $0x4] sm:$0xf]
  %v153 = vld [vmem:[%s5 + $0x8] sm:$0xf]
  %v154 = vld [vmem:[%s5 + $0xc] sm:$0xf]
  %v155 = vld [vmem:[%s5 + $0x10] sm:$0xf]
  %v156 = vld [vmem:[%s5 + $0x14] sm:$0xf]
  %v157 = vld [vmem:[%s5 + $0x18] sm:$0xf]
  %v158 = vld [vmem:[%s5 + $0x1c] sm:$0xf]
  %v159 = vld [vmem:[%s5 + $0x20] sm:$0xf]
  %v160 = vld [vmem:[%s5 + $0x24] sm:$0xf]
  %v161 = vld [vmem:[%s5 + $0x28] sm:$0xf]
  %v162 = vld [vmem:[%s5 + $0x2c] sm:$0xf]
  %v163 = vld [vmem:[%s5 + $0x30] sm:$0xf]
  %v164 = vld [vmem:[%s5 + $0x34] sm:$0xf]
  %v165 = vld [vmem:[%s5 + $0x38] sm:$0xf]
  %v166 = vld [vmem:[%s5 + $0x3c] sm:$0xf]
  %v167 = vld [vmem:[%s6] sm:$0x1]
  %v169 = vlaneseq
  %v170 = vshrl.u32 %v169, 7
  %v171 = vsub.s32 0, %v170
  %v172 = vrot.slane %v167, %v171
  %v190 = vunpack.c.l.b16 %v151
  %v191 = vunpack.c.l.b16 %v152
  %v192 = vunpack.c.l.b16 %v153
  %v193 = vunpack.c.l.b16 %v154
  %v194 = vunpack.c.l.b16 %v155
  %v195 = vunpack.c.l.b16 %v156
  %v196 = vunpack.c.l.b16 %v157
  %v197 = vunpack.c.l.b16 %v158
  %v198 = vunpack.c.l.b16 %v159
  %v199 = vunpack.c.l.b16 %v160
  %v200 = vunpack.c.l.b16 %v161
  %v201 = vunpack.c.l.b16 %v162
  %v202 = vunpack.c.l.b16 %v163
  %v203 = vunpack.c.l.b16 %v164
  %v204 = vunpack.c.l.b16 %v165
  %v205 = vunpack.c.l.b16 %v166
  %v206 = vpack.c.b16 %v191, %v190
  %v207 = vpack.c.b16 %v193, %v192
  %v208 = vpack.c.b16 %v195, %v194
  %v209 = vpack.c.b16 %v197, %v196
  %v210 = vpack.c.b16 %v199, %v198
  %v211 = vpack.c.b16 %v201, %v200
  %v212 = vpack.c.b16 %v203, %v202
  %v213 = vpack.c.b16 %v205, %v204
  %222 = vmatprep.subr.bf16.mxu0 0
  %223 = vmatpush1.bf16.msra.mxu0 %v213
  %224 = vmatprep.subr.bf16.mxu0 0
  %225 = vmatpush1.bf16.msra.mxu0 %v212
  %226 = vmatprep.subr.bf16.mxu0 0
  %227 = vmatpush1.bf16.msra.mxu0 %v211
  %228 = vmatprep.subr.bf16.mxu0 0
  %229 = vmatpush1.bf16.msra.mxu0 %v210
  %230 = vmatprep.subr.bf16.mxu0 0
  %231 = vmatpush1.bf16.msra.mxu0 %v209
  %232 = vmatprep.subr.bf16.mxu0 0
  %233 = vmatpush1.bf16.msra.mxu0 %v208
  %234 = vmatprep.subr.bf16.mxu0 0
  %235 = vmatpush1.bf16.msra.mxu0 %v207
  %236 = vmatprep.subr.bf16.mxu0 0
  %237 = vmatpush1.bf16.msra.mxu0 %v206
  %238 = vmatprep.subr.bf16.mxu0 0
  %239 = vmatpush2.bf16.msra.mxu0 0
  %240 = vmatprep.subr.bf16.mxu0 0
  %241 = vmatpush2.bf16.msra.mxu0 0
  %242 = vmatprep.subr.bf16.mxu0 0
  %243 = vmatpush2.bf16.msra.mxu0 0
  %244 = vmatprep.subr.bf16.mxu0 0
  %245 = vmatpush2.bf16.msra.mxu0 0
  %246 = vmatprep.subr.bf16.mxu0 0
  %247 = vmatpush2.bf16.msra.mxu0 0
  %248 = vmatprep.subr.bf16.mxu0 0
  %249 = vmatpush2.bf16.msra.mxu0 0
  %250 = vmatprep.subr.bf16.mxu0 0
  %251 = vmatpush2.bf16.msra.mxu0 0
  %252 = vmatprep.subr.bf16.mxu0 0
  %253 = vmatpush2.bf16.msra.mxu0 0
  %254 = vmatprep.mubr.bf16.mxu0 0
  %255 = vmatmul.mubr.bf16.gmra.mxu0 %v150
  %v256 = vpop.f32.mrf.mxu0
  %v257 = vadd.f32 %v172, %v256
  %v258 = vpop.f32.mrf.mxu0
  %v259 = vpop.f32.mrf.mxu0
  %v260 = vpop.f32.mrf.mxu0
  %261 = vdwg.mxu0
  %v262 = vmax.f32 %v257, 0.0
  %v263 = vld [vmem:[%s7] sm:$0x1]
  %v265 = vlaneseq
  %v266 = vshrl.u32 %v265, 7
  %v267 = vsub.s32 0, %v266
  %v268 = vrot.slane %v263, %v267
  %v270 = vmul.f32 %v262, %v268
  %vm271 = vcmask 523264
  %v272 = vsel %vm271, %v270, 0.0
  %273 = vadd.xlane.f32.xlu0 %v272
  %v274 = vpop.xlane.xlu0 %273
  %v275 = vld [vmem:[#allocation2] sm:$0x1]
  %v277 = vlaneseq
  %v278 = vshrl.u32 %v277, 7
  %v279 = vsub.s32 0, %v278
  %v280 = vrot.slane %v275, %v279
  %v282 = vadd.f32 %v274, %v280
  %v283 = vxor.u32 %v282, 2147483648
  %v284 = vmul.f32 %v283, 1.442695
  %v285 = vpow.pop %v284
  %v286 = vadd.f32 %v285, 1.0
  %v287 = vrcp.pop %v286
  %v288 = vmul.f32 1.0, %v287
  %vm289 = vcmask 7168
  %290 = vst.msk [vmem:[%s9] sm:$0xff] %vm289, %v288
  // Predicated region
  $region38: #{tpu_custom_call.1} parent=0 // pred_check
    _
  $region39: #{tpu_custom_call.1} parent=0 // pred_check_branch
    %292 = sbr.rel (0) target = $region41
  $region40: #{tpu_custom_call.1} parent=0 // pred_region
    _
  $region41: #{tpu_custom_call.1} parent=0 // pred_fallthru
    _
  // Predicated region
  $region42: #{tpu_custom_call.1} parent=0 // pred_check
    _
  $region43: #{tpu_custom_call.1} parent=0 // pred_check_branch
    %294 = sbr.rel (0) target = $region45
  $region44: #{tpu_custom_call.1} parent=0 // pred_region
    _
  $region45: #{tpu_custom_call.1} parent=0 // pred_fallthru
    _

</llo_original>
